<compile_context>
chip_gen: v6e
topology: v6e:2x2x1
jax: 0.10.0
libtpu: 0.0.40
codegen_flags: <defaults>
</compile_context>

<pallas_src>
import functools
import math

import jax
import jax.numpy as jnp
from jax.experimental import pallas as pl
from jax.experimental.pallas import tpu as pltpu


_LANE = 128

# Matmul tile caps: larger output tiles raise arithmetic intensity; 256-aligned
# matches the 2x256^2 MXU (v6e/v7x) and maps cleanly onto v5e's 4x128^2 MXU.
_TM_CAP = 256
_TN_CAP = 256
_TK_CAP = 512


def _round_up(x, m):
    return ((x + m - 1) // m) * m


@functools.lru_cache(maxsize=None)
def _vmem_limit():
    """Generation-aware scoped-VMEM limit (don't hardcode 32 MiB)."""
    try:
        cap = int(pltpu.get_tpu_info().vmem_capacity_bytes)
    except Exception:
        cap = 64 * 1024 * 1024  # conservative fallback (safe on v7x too)
    # ~75% of physical: ~96 MiB on v5e/v6e (128 MiB), ~48 MiB on v7x (64 MiB).
    return min((cap * 3) // 4, 96 * 1024 * 1024)


# ----------------------------------------------------------------------------
# Pallas kernels: tiled Linear forward   y = x @ W + b
# ----------------------------------------------------------------------------
def _linear_kernel_accum_out(x_ref, w_ref, b_ref, o_ref):
    """f32 output: accumulate directly into o_ref (resident across k)."""
    @pl.when(pl.program_id(2) == 0)
    def _():
        o_ref[...] = jnp.broadcast_to(b_ref[...], o_ref.shape)

    o_ref[...] += jnp.dot(x_ref[...], w_ref[...],
                          preferred_element_type=jnp.float32)


def _linear_kernel_scratch(x_ref, w_ref, b_ref, o_ref, acc_ref):
    """Low-precision output: f32 VMEM accumulator + finalize cast."""
    k = pl.program_id(2)

    @pl.when(k == 0)
    def _():
        acc_ref[...] = jnp.broadcast_to(b_ref[...], acc_ref.shape)

    acc_ref[...] += jnp.dot(x_ref[...], w_ref[...],
                            preferred_element_type=jnp.float32)

    @pl.when(k == pl.num_programs(2) - 1)
    def _():
        o_ref[...] = acc_ref[...].astype(o_ref.dtype)


def _tile_and_pad(dim, cap):
    """Return (tile, padded_dim). Full dim if small, else cap-sized tiles."""
    if dim <= cap:
        return dim, dim
    return cap, _round_up(dim, cap)


def _linear_forward(params, x, *, use_bf16_inputs=True):
    w, b = params["w"], params["b"]
    M, K = x.shape
    K2, N = w.shape
    assert K == K2
    out_dtype = x.dtype

    in_dtype = x.dtype
    if use_bf16_inputs and x.dtype == jnp.float32:
        in_dtype = jnp.bfloat16  # MXU-native on v5e/v6e/v7x, halves A/B traffic

    tm, Mp = _tile_and_pad(M, _TM_CAP)
    tn, Np = _tile_and_pad(N, _TN_CAP)
    tk, Kp = _tile_and_pad(K, _TK_CAP)

    xk = x.astype(in_dtype)
    wk = w.astype(in_dtype)
    bk = b.astype(jnp.float32).reshape(1, N)
    if (Mp, Kp) != (M, K):
        xk = jnp.pad(xk, ((0, Mp - M), (0, Kp - K)))
    if (Kp, Np) != (K, N):
        wk = jnp.pad(wk, ((0, Kp - K), (0, Np - N)))
    if Np != N:
        bk = jnp.pad(bk, ((0, 0), (0, Np - N)))

    grid = (Mp // tm, Np // tn, Kp // tk)

    if out_dtype == jnp.float32:
        kernel = _linear_kernel_accum_out
        scratch = ()
    else:
        kernel = _linear_kernel_scratch
        scratch = (pltpu.VMEM((tm, tn), jnp.float32),)

    out = pl.pallas_call(
        kernel,
        out_shape=jax.ShapeDtypeStruct((Mp, Np), out_dtype),
        grid_spec=pltpu.PrefetchScalarGridSpec(
            num_scalar_prefetch=0,
            grid=grid,
            in_specs=[
                pl.BlockSpec((tm, tk), lambda i, j, k: (i, k)),
                pl.BlockSpec((tk, tn), lambda i, j, k: (k, j)),
                pl.BlockSpec((1, tn), lambda i, j, k: (0, j)),
            ],
            out_specs=pl.BlockSpec((tm, tn), lambda i, j, k: (i, j)),
            scratch_shapes=scratch,
        ),
        compiler_params=pltpu.CompilerParams(
            dimension_semantics=("parallel", "parallel", "arbitrary"),
            vmem_limit_bytes=_vmem_limit(),
        ),
    )(xk, wk, bk)

    if (Mp, Np) != (M, N):
        out = out[:M, :N]
    return out


linear_forward = jax.jit(_linear_forward, static_argnames=("use_bf16_inputs",))


# ----------------------------------------------------------------------------
# Fused EMA update: one multi-input pallas_call over all parameter leaves
#   shadow <- shadow - (1 - decay) * (shadow - p)     (exact PyTorch form)
# ----------------------------------------------------------------------------
def _leaf_view_shape(shape):
    """Lane-dense 2D view of a leaf reachable by a zero-copy reshape."""
    size = int(math.prod(shape)) if shape else 1
    if size % _LANE == 0:
        return (size // _LANE, _LANE)
    if len(shape) >= 2:
        return (size // shape[-1], shape[-1])
    return (1, size)


# ----------------------------------------------------------------------------
# EMA wrapper (mirrors the PyTorch nn.Module semantics)
# ----------------------------------------------------------------------------
class EMA:
    def __init__(self, model_apply, model_params, decay: float):
        self.decay = float(decay)
        self.model_apply = model_apply
        self.params = model_params
        self.training = True

        leaves, self._treedef = jax.tree_util.tree_flatten(model_params)
        self._leaf_shapes = [l.shape for l in leaves]
        self._leaf_dtypes = [l.dtype for l in leaves]
        self._view_shapes = [_leaf_view_shape(l.shape) for l in leaves]
        self._n_leaves = len(leaves)

        # Fused update keeps every leaf VMEM-resident for one grid-less call.
        fused_bytes = sum(3 * 4 * math.prod(vs) for vs in self._view_shapes)
        assert fused_bytes <= _vmem_limit() // 2, (
            f"fused EMA update needs ~{fused_bytes} bytes of VMEM; model too "
            "large for the single fused call")
        # TODO(synk): for models larger than VMEM, fall back to a tiled slab
        # update with >=2 grid steps (keeps both v7x TensorCores busy).

        # shadow = detached copy of params (explicit copy so donation of the
        # shadow buffers can never alias/clobber caller-owned param arrays),
        # stored as f32 lane-dense 2D views (f32 so EMA accumulation never
        # drifts even if the live params are bf16).
        self._shadow_views = tuple(
            jnp.reshape(jnp.array(l, dtype=jnp.float32), vs)
            for l, vs in zip(leaves, self._view_shapes))
        self._shadow_cache = None
        self._update_fn = self._build_update_fn()
        self._unflatten_fn = jax.jit(self._unflatten_impl)

    # -- fused, aliased, in-place EMA update ----------------------------------
    def _build_update_fn(self):
        n_leaves = self._n_leaves
        view_shapes = self._view_shapes
        one_minus_decay = 1.0 - self.decay

        def fused_ema_kernel(*refs):
            s_refs = refs[:n_leaves]
            p_refs = refs[n_leaves:2 * n_leaves]
            o_refs = refs[2 * n_leaves:]
            for i in range(n_leaves):
                s = s_refs[i][...]
                # params stream may be bf16 (half the HBM traffic of f32);
                # the cast to f32 is a free VPU op under a DMA-bound kernel.
                p = p_refs[i][...].astype(jnp.float32)
                o_refs[i][...] = s - one_minus_decay * (s - p)

        ema_call = pl.pallas_call(
            fused_ema_kernel,
            out_shape=[jax.ShapeDtypeStruct(vs, jnp.float32)
                       for vs in view_shapes],
            # shadow input i aliases output i -> in-place update, 3N traffic
            input_output_aliases={i: i for i in range(n_leaves)},
            compiler_params=pltpu.CompilerParams(
                vmem_limit_bytes=_vmem_limit()),
        )

        def update(shadow_views, params):
            leaves = jax.tree_util.tree_leaves(params)
            # zero-copy lane-dense 2D views of the live params: no repacking,
            # no extra HBM pass.
            p_views = [jnp.reshape(l, vs)
                       for l, vs in zip(leaves, view_shapes)]
            new_views = ema_call(*shadow_views, *p_views)
            if not isinstance(new_views, (list, tuple)):
                new_views = (new_views,)
            return tuple(new_views)

        # donate the old shadow buffers so XLA honors the in-place alias
        return jax.jit(update, donate_argnums=(0,))

    # -- shadow pytree view (jitted, cached) -----------------------------------
    def _unflatten_impl(self, shadow_views):
        out = [jnp.reshape(v, shp).astype(dt)
               for v, shp, dt in zip(shadow_views, self._leaf_shapes,
                                     self._leaf_dtypes)]
        return jax.tree_util.tree_unflatten(self._treedef, out)

    # -- public API mirroring the PyTorch module ------------------------------
    def update(self):
        if not self.training:
            print("EMA update should only be called during training")
            return
        self._shadow_views = self._update_fn(self._shadow_views, self.params)
        self._shadow_cache = None
        # TODO(synk): buffer copy (shadow_buffers.copy_(buffer)) omitted —
        # the synthetic inner Linear model has no buffers.

    @property
    def shadow(self):
        if self._shadow_cache is None:
            self._shadow_cache = self._unflatten_fn(self._shadow_views)
        return self._shadow_cache

    def __call__(self, x):
        if self.training:
            return self.model_apply(self.params, x)
        return self.model_apply(self.shadow, x)


# ----------------------------------------------------------------------------
# Demo / correctness check
# ----------------------------------------------------------------------------
if __name__ == "__main__":
    key = jax.random.PRNGKey(0)
    kx, kw, kb, kg = jax.random.split(key, 4)

    B, IN, OUT = 8, 128, 128
    decay = 0.99

    x = jax.random.normal(kx, (B, IN), dtype=jnp.float32)
    params = {
        "w": jax.random.normal(kw, (IN, OUT), dtype=jnp.float32) * 0.02,
        "b": jax.random.normal(kb, (OUT,), dtype=jnp.float32) * 0.02,
    }

    ema = EMA(linear_forward, params, decay)

    # bf16-rounded inputs (what the MXU actually consumes) for tight reference
    def bf16r(a):
        return a.astype(jnp.bfloat16).astype(jnp.float32)

    # -- training-mode forward: delegates to model ---------------------------
    ema.training = True
    y_train = jax.block_until_ready(ema(x))
    y_ref = bf16r(x) @ bf16r(params["w"]) + params["b"][None, :]
    assert jnp.allclose(y_train, y_ref, atol=1e-3, rtol=1e-3)
    # loose sanity check against the pure-f32 math
    assert jnp.allclose(y_train, x @ params["w"] + params["b"][None, :],
                        atol=5e-2, rtol=5e-2)

    # -- simulate a training step (model params move), then EMA update -------
    old_shadow = jax.tree_util.tree_map(jnp.array, ema.shadow)
    grads = {
        "w": jax.random.normal(kg, (IN, OUT), dtype=jnp.float32) * 0.01,
        "b": jnp.full((OUT,), 0.01, dtype=jnp.float32),
    }
    ema.params = jax.tree_util.tree_map(lambda p, g: p - g, ema.params, grads)

    ema.update()
    jax.block_until_ready(ema._shadow_views)

    shadow_ref = jax.tree_util.tree_map(
        lambda s, p: s - (1.0 - decay) * (s - p), old_shadow, ema.params
    )
    new_shadow = ema.shadow
    for name in ("w", "b"):
        assert jnp.allclose(new_shadow[name], shadow_ref[name],
                            atol=1e-5, rtol=1e-5)

    # -- eval-mode forward: delegates to shadow ------------------------------
    ema.training = False
    y_eval = jax.block_until_ready(ema(x))
    y_eval_ref = bf16r(x) @ bf16r(shadow_ref["w"]) + shadow_ref["b"][None, :]
    assert jnp.allclose(y_eval, y_eval_ref, atol=1e-3, rtol=1e-3)

    print("KERNEL_OK")
</pallas_src>

<mosaic_0001>
module attributes {stable_mosaic.version = 11 : i64} {
  func.func @_linear_kernel_accum_out(%arg0: i32, %arg1: i32, %arg2: i32, %arg3: memref<8x128xbf16, #tpu.memory_space<vmem>>, %arg4: memref<128x128xbf16, #tpu.memory_space<vmem>>, %arg5: memref<1x128xf32, #tpu.memory_space<vmem>>, %arg6: memref<8x128xf32, #tpu.memory_space<vmem>>) attributes {dimension_semantics = [#tpu.dimension_semantics<parallel>, #tpu.dimension_semantics<parallel>, #tpu.dimension_semantics<arbitrary>], iteration_bounds = array<i64: 1, 1, 1>, scalar_prefetch = 0 : i64, scratch_operands = 0 : i64, tpu.core_type = #tpu.core_type<tc>, window_params = [{transform_indices = @transform_0, window_bounds = array<i64: 8, 128>}, {transform_indices = @transform_1, window_bounds = array<i64: 128, 128>}, {transform_indices = @transform_2, window_bounds = array<i64: 1, 128>}, {transform_indices = @transform_3, window_bounds = array<i64: 8, 128>}]} {
    %c0_i32 = arith.constant 0 : i32
    %0 = arith.cmpi eq, %arg2, %c0_i32 : i32
    %1 = arith.extui %0 : i1 to i32
    %c0_i32_0 = arith.constant 0 : i32
    %2 = arith.cmpi ne, %1, %c0_i32_0 : i32
    scf.if %2 {
      %c0_8 = arith.constant 0 : index
      %c0_9 = arith.constant 0 : index
      %9 = vector.load %arg5[%c0_8, %c0_9] : memref<1x128xf32, #tpu.memory_space<vmem>>, vector<1x128xf32>
      %10 = vector.shape_cast %9 : vector<1x128xf32> to vector<1x128xf32>
      %11 = vector.broadcast %10 : vector<1x128xf32> to vector<8x128xf32>
      %c0_10 = arith.constant 0 : index
      %c0_11 = arith.constant 0 : index
      %12 = vector.load %arg6[%c0_10, %c0_11] : memref<8x128xf32, #tpu.memory_space<vmem>>, vector<8x128xf32>
      tpu.vector_store %arg6[%c0_10, %c0_11], %11 {strides = array<i32>} : memref<8x128xf32, #tpu.memory_space<vmem>>, vector<8x128xf32>,
    } else {
    }
    %c0 = arith.constant 0 : index
    %c0_1 = arith.constant 0 : index
    %3 = vector.load %arg6[%c0, %c0_1] : memref<8x128xf32, #tpu.memory_space<vmem>>, vector<8x128xf32>
    %c0_2 = arith.constant 0 : index
    %c0_3 = arith.constant 0 : index
    %4 = vector.load %arg3[%c0_2, %c0_3] : memref<8x128xbf16, #tpu.memory_space<vmem>>, vector<8x128xbf16>
    %c0_4 = arith.constant 0 : index
    %c0_5 = arith.constant 0 : index
    %5 = vector.load %arg4[%c0_4, %c0_5] : memref<128x128xbf16, #tpu.memory_space<vmem>>, vector<128x128xbf16>
    %cst = arith.constant dense<0.000000e+00> : vector<8x128xf32>
    %6 = tpu.matmul %4, %5, %cst {dimension_numbers = #tpu.dot_dimension_numbers<[1], [0], [0], [1], [0, 0, 1, 1], [], []>} : vector<8x128xbf16>, vector<128x128xbf16>, vector<8x128xf32> -> vector<8x128xf32>
    %7 = arith.addf %3, %6 : vector<8x128xf32>
    %c0_6 = arith.constant 0 : index
    %c0_7 = arith.constant 0 : index
    %8 = vector.load %arg6[%c0_6, %c0_7] : memref<8x128xf32, #tpu.memory_space<vmem>>, vector<8x128xf32>
    tpu.vector_store %arg6[%c0_6, %c0_7], %7 {strides = array<i32>} : memref<8x128xf32, #tpu.memory_space<vmem>>, vector<8x128xf32>,
    return
  }
  func.func @transform_0(%arg0: i32, %arg1: i32, %arg2: i32) -> (i32, i32) {
    %c0_i32 = arith.constant 0 : i32
    return %arg0, %arg2 : i32, i32
  }
  func.func @transform_1(%arg0: i32, %arg1: i32, %arg2: i32) -> (i32, i32) {
    %c0_i32 = arith.constant 0 : i32
    return %arg2, %arg1 : i32, i32
  }
  func.func @transform_2(%arg0: i32, %arg1: i32, %arg2: i32) -> (i32, i32) {
    %c0_i32 = arith.constant 0 : i32
    %c0_i32_0 = arith.constant 0 : i32
    return %c0_i32, %arg1 : i32, i32
  }
  func.func @transform_3(%arg0: i32, %arg1: i32, %arg2: i32) -> (i32, i32) {
    %c0_i32 = arith.constant 0 : i32
    return %arg0, %arg1 : i32, i32
  }
}

</mosaic_0001>

<llo_original>
// kernel: _linear_forward.1
$region0: #{_linear_forward.1}
  #allocation0 [shape = 'u32[]', space=smem, size = 0x4, offset = 0x4, fixed_abs, tag = 'smem constant byte address 0x4 - core index']
  #allocation1 [shape = 'u32[144,128]{1,0:T(1,128)}', space=vmem, size = 0x12000, scoped, tag = 'internal scratch']
  %s0 = inlined_call_operand.vmem [shape: bf16[8,128], index: 0, kind: input, shape index: {}]
  %s1 = inlined_call_operand.vmem [shape: bf16[128,128], index: 1, kind: input, shape index: {}]
  %s2 = inlined_call_operand.vmem [shape: f32[1,128], index: 2, kind: input, shape index: {}]
  %s3 = inlined_call_operand.hbm [shape: f32[8,128], index: 3, kind: output, shape index: {}]
  %s4 = sld [smem:[#allocation0]]
  $region26: #{_linear_forward.1} parent=0
    _
  %s6 = ssub.s32 1, %s4
  %s7 = scalar_select 0, %s6, %s4
  $region1: #{_linear_forward.1} parent=0
    #allocation2 [shape = 'u8[4096]{0}', space=vmem, size = 0x1000, scoped, tag = 'output window, operand 0, single buffered']
    #allocation3 [shape = 's32[1]{0}', space=sflag, size = 0x4, scoped, tag = 'scoped memory for _linear_forward.1']
    %8 = vsyncpa [#allocation3], 0
    // Predicated region
    $region2: #{_linear_forward.1} parent=1 // pred_check
      _
    $region3: #{_linear_forward.1} parent=1 // pred_check_branch
      %10 = sbr.rel (0) target = $region5
    $region4: #{_linear_forward.1} parent=1 // pred_region
      _
    $region5: #{_linear_forward.1} parent=1 // pred_fallthru
      _
    // Predicated region
    $region6: #{_linear_forward.1} parent=1 // pred_check
      _
    $region7: #{_linear_forward.1} parent=1 // pred_check_branch
      %12 = sbr.rel (0) target = $region9
    $region8: #{_linear_forward.1} parent=1 // pred_region
      _
    $region9: #{_linear_forward.1} parent=1 // pred_fallthru
      _
    // Predicated region
    $region10: #{_linear_forward.1} parent=1 // pred_check
      _
    $region11: #{_linear_forward.1} parent=1 // pred_check_branch
      %14 = sbr.rel (0) target = $region13
    $region12: #{_linear_forward.1} parent=1 // pred_region
      _
    $region13: #{_linear_forward.1} parent=1 // pred_fallthru
      _
    %p16 = scmp.eq.s32.totalorder 0, 0
    // Predicated region
    $region14: #{_linear_forward.1} parent=1 // pred_check
      %p17 = pneg %p16
    $region15: #{_linear_forward.1} parent=1 // pred_check_branch
      %19 = sbr.rel (%p17) target = $region17
    $region16: #{_linear_forward.1} parent=1 // pred_region
      %v20 = vld [vmem:[%s2] sm:$0x1]
      %v22 = vlaneseq
      %v23 = vshrl.u32 %v22, 7
      %v24 = vsub.s32 0, %v23
      %v25 = vrot.slane %v20, %v24
      %27 = vst [vmem:[#allocation2] sm:$0xff] %v25
    $region17: #{_linear_forward.1} parent=1 // pred_fallthru
      _
    %v28 = vld [vmem:[#allocation2] sm:$0xff]
    %v29 = vld [vmem:[%s0] sm:$0xf]
    %v30 = vld [vmem:[%s1] sm:$0xf]
    %v31 = vld [vmem:[%s1 + $0x4] sm:$0xf]
    %v32 = vld [vmem:[%s1 + $0x8] sm:$0xf]
    %v33 = vld [vmem:[%s1 + $0xc] sm:$0xf]
    %v34 = vld [vmem:[%s1 + $0x10] sm:$0xf]
    %v35 = vld [vmem:[%s1 + $0x14] sm:$0xf]
    %v36 = vld [vmem:[%s1 + $0x18] sm:$0xf]
    %v37 = vld [vmem:[%s1 + $0x1c] sm:$0xf]
    %v38 = vld [vmem:[%s1 + $0x20] sm:$0xf]
    %v39 = vld [vmem:[%s1 + $0x24] sm:$0xf]
    %v40 = vld [vmem:[%s1 + $0x28] sm:$0xf]
    %v41 = vld [vmem:[%s1 + $0x2c] sm:$0xf]
    %v42 = vld [vmem:[%s1 + $0x30] sm:$0xf]
    %v43 = vld [vmem:[%s1 + $0x34] sm:$0xf]
    %v44 = vld [vmem:[%s1 + $0x38] sm:$0xf]
    %v45 = vld [vmem:[%s1 + $0x3c] sm:$0xf]
    %v62 = vunpack.c.l.b16 %v30
    %v63 = vunpack.c.l.b16 %v31
    %v64 = vunpack.c.l.b16 %v32
    %v65 = vunpack.c.l.b16 %v33
    %v66 = vunpack.c.l.b16 %v34
    %v67 = vunpack.c.l.b16 %v35
    %v68 = vunpack.c.l.b16 %v36
    %v69 = vunpack.c.l.b16 %v37
    %v70 = vunpack.c.l.b16 %v38
    %v71 = vunpack.c.l.b16 %v39
    %v72 = vunpack.c.l.b16 %v40
    %v73 = vunpack.c.l.b16 %v41
    %v74 = vunpack.c.l.b16 %v42
    %v75 = vunpack.c.l.b16 %v43
    %v76 = vunpack.c.l.b16 %v44
    %v77 = vunpack.c.l.b16 %v45
    %v78 = vpack.c.b16 %v63, %v62
    %v79 = vpack.c.b16 %v65, %v64
    %v80 = vpack.c.b16 %v67, %v66
    %v81 = vpack.c.b16 %v69, %v68
    %v82 = vpack.c.b16 %v71, %v70
    %v83 = vpack.c.b16 %v73, %v72
    %v84 = vpack.c.b16 %v75, %v74
    %v85 = vpack.c.b16 %v77, %v76
    %94 = vmatprep.subr.bf16.mxu0 0
    %95 = vmatpush1.bf16.msra.mxu0 %v85
    %96 = vmatprep.subr.bf16.mxu0 0
    %97 = vmatpush1.bf16.msra.mxu0 %v84
    %98 = vmatprep.subr.bf16.mxu0 0
    %99 = vmatpush1.bf16.msra.mxu0 %v83
    %100 = vmatprep.subr.bf16.mxu0 0
    %101 = vmatpush1.bf16.msra.mxu0 %v82
    %102 = vmatprep.subr.bf16.mxu0 0
    %103 = vmatpush1.bf16.msra.mxu0 %v81
    %104 = vmatprep.subr.bf16.mxu0 0
    %105 = vmatpush1.bf16.msra.mxu0 %v80
    %106 = vmatprep.subr.bf16.mxu0 0
    %107 = vmatpush1.bf16.msra.mxu0 %v79
    %108 = vmatprep.subr.bf16.mxu0 0
    %109 = vmatpush1.bf16.msra.mxu0 %v78
    %110 = vmatprep.subr.bf16.mxu0 0
    %111 = vmatpush2.bf16.msra.mxu0 0
    %112 = vmatprep.subr.bf16.mxu0 0
    %113 = vmatpush2.bf16.msra.mxu0 0
    %114 = vmatprep.subr.bf16.mxu0 0
    %115 = vmatpush2.bf16.msra.mxu0 0
    %116 = vmatprep.subr.bf16.mxu0 0
    %117 = vmatpush2.bf16.msra.mxu0 0
    %118 = vmatprep.subr.bf16.mxu0 0
    %119 = vmatpush2.bf16.msra.mxu0 0
    %120 = vmatprep.subr.bf16.mxu0 0
    %121 = vmatpush2.bf16.msra.mxu0 0
    %122 = vmatprep.subr.bf16.mxu0 0
    %123 = vmatpush2.bf16.msra.mxu0 0
    %124 = vmatprep.subr.bf16.mxu0 0
    %125 = vmatpush2.bf16.msra.mxu0 0
    %126 = vmatprep.mubr.bf16.mxu0 0
    %127 = vmatmul.mubr.bf16.gmra.mxu0 %v29
    %v128 = vpop.f32.mrf.mxu0
    %v129 = vadd.f32 0.0, %v128
    %v130 = vpop.f32.mrf.mxu0
    %v131 = vpop.f32.mrf.mxu0
    %v132 = vpop.f32.mrf.mxu0
    %133 = vdwg.mxu0
    %v134 = vadd.f32 %v28, %v129
    %135 = vst [vmem:[#allocation2] sm:$0xff] %v134
    // Predicated region
    $region18: #{_linear_forward.1} parent=1 // pred_check
      _
    $region19: #{_linear_forward.1} parent=1 // pred_check_branch
      %137 = sbr.rel (0) target = $region21
    $region20: #{_linear_forward.1} parent=1 // pred_region
      %s139 = ssub.s32 128, 128
      %140 = vsyncadd [#allocation3], %s139
      %s142 = sshll.u32 [#allocation2], 4
      %s143 = int_to_ptr.vmem [resolvable:$true] %s142
      %145 = dma.vmem_to_hbm [thread:$0]  %s143, 128, %s3, [#allocation3]
    $region21: #{_linear_forward.1} parent=1 // pred_fallthru
      _
    // Predicated region
    $region22: #{_linear_forward.1} parent=1 // pred_check
      _
    $region23: #{_linear_forward.1} parent=1 // pred_check_branch
      %147 = sbr.rel (0) target = $region25
    $region24: #{_linear_forward.1} parent=1 // pred_region
      %148 = dma.done [#allocation3], 128
    $region25: #{_linear_forward.1} parent=1 // pred_fallthru
      _
    %149 = vsyncpa [#allocation3], 1

</llo_original>
